<compile_context>
chip_gen: v7x
topology: tpu7x:2x2x1
jax: 0.10.0
libtpu: 0.0.40
codegen_flags: <defaults>
</compile_context>

<pallas_src>
import jax
import jax.numpy as jnp
from jax.experimental import pallas as pl
from jax.experimental.pallas import tpu as pltpu

LANE = 128
SUB = 8


def _round_up(x, m):
    return -(-x // m) * m


# ---------------------------------------------------------------------------
# Pallas kernel factory (dims / slab layout baked in as static constants)
# ---------------------------------------------------------------------------
def _make_kernel(Np, F, H, L, G, ocols):
    # node-data slab: every field starts on a 128-lane boundary
    cX, cE, cU = 0, LANE, 2 * LANE
    # weight slab row offsets (sublane aligned): [w1 | wmu|wls | wdx|wg | wl | 4 bias rows]
    rW1 = 0
    rWMS = _round_up(F, SUB)
    rWDG = rWMS + _round_up(H, SUB)
    rWL = rWDG + _round_up(L, SUB)
    rB = rWL + _round_up(L, SUB)
    opad = ocols - (F + G + 1 + 3 * L)

    def kernel(a_ref, data_ref, w_ref, out_ref):
        f32 = jnp.float32
        bf16 = jnp.bfloat16

        a = a_ref[0]                                  # (Np, Np) bf16
        x = data_ref[0, :, cX:cX + F]                 # f32, lane-aligned ref slices
        eps = data_ref[0, :, cE:cE + L]
        u = data_ref[0, :, cU:cU + G]

        w1 = w_ref[rW1:rW1 + F, 0:H]                  # bf16 weights
        wmuls = w_ref[rWMS:rWMS + H, 0:2 * L]
        wdxg = w_ref[rWDG:rWDG + L, 0:F + G]
        wl = w_ref[rWL:rWL + L, 0:1]
        b1 = w_ref[rB:rB + 1, 0:H].astype(f32)
        bmuls = w_ref[rB + 1:rB + 2, 0:2 * L].astype(f32)
        bdxg = w_ref[rB + 2:rB + 3, 0:F + G].astype(f32)
        bl = w_ref[rB + 3:rB + 4, 0:1].astype(f32)

        # ----- conv1, reassociated: (A @ x) @ w1 so the N^2 matmul contracts
        # over F (<= H); relu in f32 on the VPU.
        ax = jnp.dot(a, x.astype(bf16), preferred_element_type=f32)
        h1 = jnp.maximum(
            jnp.dot(ax.astype(bf16), w1, preferred_element_type=f32) + b1, 0.0)

        # ----- mu / logstd heads share one A-aggregation (A@(h@W) == (A@h)@W)
        ah1 = jnp.dot(a, h1.astype(bf16), preferred_element_type=f32)
        enc = jnp.dot(ah1.astype(bf16), wmuls, preferred_element_type=f32) + bmuls
        mu = enc[:, :L]
        # conv_logstd head; the reference forward names it "logvar" and uses
        # std = exp(0.5 * logvar) — reproduced exactly as written in torch.
        logvar = enc[:, L:2 * L]

        # ----- reparameterize (f32 elementwise): z = eps * exp(0.5*logvar) + mu
        z = eps * jnp.exp(0.5 * logvar) + mu

        # ----- recon / gender heads share one A-aggregation over z
        az = jnp.dot(a, z.astype(bf16), preferred_element_type=f32)
        dec = jnp.dot(az.astype(bf16), wdxg, preferred_element_type=f32) + bdxg
        recon = dec[:, :F]
        logits_gender = dec[:, F:F + G]

        logits_label = jnp.dot(z.astype(bf16), wl, preferred_element_type=f32) + bl

        # ----- hard Gumbel (temperature=1, hard=True): forward value is the
        # argmax one-hot of logits + gumbel noise (softmax is monotone so
        # exp/sum/divide are skipped). Ties break toward lowest index.
        g = -jnp.log(-jnp.log(u + 1e-20) + 1e-20)
        y = logits_gender + g
        if G == 2:
            # pairwise compare — pure VPU, no cross-lane reduction
            hot0 = (y[:, 0:1] >= y[:, 1:2]).astype(f32)
            gender = jnp.concatenate([hot0, 1.0 - hot0], axis=-1)
        else:
            col = jax.lax.broadcasted_iota(jnp.int32, y.shape, 1)
            is_max = y >= jnp.max(y, axis=-1, keepdims=True)
            first = jnp.min(jnp.where(is_max, col, G), axis=-1, keepdims=True)
            gender = (col == first).astype(f32)
        # TODO(synk): straight-through estimator returns the hard one-hot
        # forward value; y_soft is not materialized (forward-only kernel).

        # ----- single unmasked full-width (lane-dense) output store
        pad = jnp.zeros((Np, opad), f32)
        out_ref[0] = jnp.concatenate(
            [recon, gender, logits_label, mu, logvar, z, pad], axis=-1)

    return kernel


# ---------------------------------------------------------------------------
# Wrapper: pack slabs, one pallas_call over the batch grid, unpack outputs
# ---------------------------------------------------------------------------
def gumbel_softmax_vae_forward(a_hat, x, eps, u, params):
    squeeze = (x.ndim == 2)
    if squeeze:
        a_hat, x, eps, u = a_hat[None], x[None], eps[None], u[None]

    B, N, F = x.shape
    H = params["w1"].shape[1]
    L = params["wmu"].shape[1]
    G = params["wg"].shape[1]
    assert F + G + 1 + 3 * L <= LANE and max(H, 2 * L, F + G) <= LANE

    Np = _round_up(N, SUB)
    dcols = 3 * LANE          # x @0 | eps @128 | u @256 (each field < 128 wide)
    ocols = LANE              # recon | gender | label | mu | logvar | z | pad

    # A_hat: its own bf16 input, only row/lane zero-padding (no slab copy)
    a_pad = jnp.zeros((B, Np, Np), jnp.bfloat16)
    a_pad = a_pad.at[:, :N, :N].set(a_hat.astype(jnp.bfloat16))

    # node-data slab (f32), lane-aligned fields
    data = jnp.zeros((B, Np, dcols), jnp.float32)
    data = data.at[:, :N, 0:F].set(x)
    data = data.at[:, :N, LANE:LANE + L].set(eps)
    data = data.at[:, :N, 2 * LANE:2 * LANE + G].set(u)

    # weight slab (bf16), sublane-aligned row blocks, fused same-input heads
    rW1 = 0
    rWMS = _round_up(F, SUB)
    rWDG = rWMS + _round_up(H, SUB)
    rWL = rWDG + _round_up(L, SUB)
    rB = rWL + _round_up(L, SUB)
    wrows = _round_up(rB + 4, 16)      # 16-row multiple (bf16 sublane packing)
    w = jnp.zeros((wrows, LANE), jnp.float32)
    w = w.at[rW1:rW1 + F, 0:H].set(params["w1"])
    w = w.at[rWMS:rWMS + H, 0:2 * L].set(
        jnp.concatenate([params["wmu"], params["wls"]], axis=1))
    w = w.at[rWDG:rWDG + L, 0:F + G].set(
        jnp.concatenate([params["wdx"], params["wg"]], axis=1))
    w = w.at[rWL:rWL + L, 0:1].set(params["wl"])
    w = w.at[rB, 0:H].set(params["b1"][0])
    w = w.at[rB + 1, 0:2 * L].set(
        jnp.concatenate([params["bmu"], params["bls"]], axis=1)[0])
    w = w.at[rB + 2, 0:F + G].set(
        jnp.concatenate([params["bdx"], params["bg"]], axis=1)[0])
    w = w.at[rB + 3, 0:1].set(params["bl"][0])
    w = w.astype(jnp.bfloat16)

    kernel = _make_kernel(Np, F, H, L, G, ocols)

    out = pl.pallas_call(
        kernel,
        out_shape=jax.ShapeDtypeStruct((B, Np, ocols), jnp.float32),
        grid=(B,),
        in_specs=[
            pl.BlockSpec((1, Np, Np), lambda b: (b, 0, 0)),      # A_hat (bf16)
            pl.BlockSpec((1, Np, dcols), lambda b: (b, 0, 0)),   # x|eps|u slab
            pl.BlockSpec((wrows, LANE), lambda b: (0, 0)),       # shared weights
        ],
        out_specs=pl.BlockSpec((1, Np, ocols), lambda b: (b, 0, 0)),
        compiler_params=pltpu.CompilerParams(
            dimension_semantics=("parallel",),
            vmem_limit_bytes=32 * 1024 * 1024),
    )(a_pad, data, w)

    out = out[:, :N, :]
    recon = out[..., 0:F]
    gender = out[..., F:F + G]
    label = out[..., F + G:F + G + 1]
    mu = out[..., F + G + 1:F + G + 1 + L]
    logvar = out[..., F + G + 1 + L:F + G + 1 + 2 * L]
    z = out[..., F + G + 1 + 2 * L:F + G + 1 + 3 * L]
    outs = (recon, gender, label, mu, logvar, z)
    if squeeze:
        outs = tuple(o[0] for o in outs)
    return outs


# ---------------------------------------------------------------------------
# Glue: dense normalized adjacency  A_hat = D^{-1/2} (A + I) D^{-1/2}
# (matches torch_geometric GCNConv default gcn_norm)
# ---------------------------------------------------------------------------
def build_normalized_adjacency(edge_index, num_nodes):
    src, dst = edge_index
    loop = jnp.arange(num_nodes, dtype=src.dtype)
    src = jnp.concatenate([src, loop])
    dst = jnp.concatenate([dst, loop])
    wgt = jnp.ones_like(src, dtype=jnp.float32)
    deg = jnp.zeros((num_nodes,), jnp.float32).at[dst].add(wgt)
    dinv = jnp.where(deg > 0, 1.0 / jnp.sqrt(deg), 0.0)
    norm = dinv[src] * wgt * dinv[dst]
    a = jnp.zeros((num_nodes, num_nodes), jnp.float32).at[dst, src].add(norm)
    return a


# ---------------------------------------------------------------------------
# Deterministic parameter init (synthetic, no checkpoint)
# ---------------------------------------------------------------------------
def init_params(key, input_dim, hidden_dim, latent_dim, output_dim, gender_dim):
    keys = jax.random.split(key, 6)

    def lin(k, din, dout):
        return 0.1 * jax.random.normal(k, (din, dout), jnp.float32)

    return {
        "w1": lin(keys[0], input_dim, hidden_dim),
        "b1": jnp.zeros((1, hidden_dim), jnp.float32),
        "wmu": lin(keys[1], hidden_dim, latent_dim),
        "bmu": jnp.zeros((1, latent_dim), jnp.float32),
        "wls": lin(keys[2], hidden_dim, latent_dim),
        "bls": jnp.zeros((1, latent_dim), jnp.float32),
        "wdx": lin(keys[3], latent_dim, output_dim),
        "bdx": jnp.zeros((1, output_dim), jnp.float32),
        "wg": lin(keys[4], latent_dim, gender_dim),
        "bg": jnp.zeros((1, gender_dim), jnp.float32),
        "wl": lin(keys[5], latent_dim, 1),
        "bl": jnp.zeros((1, 1), jnp.float32),
    }


# ---------------------------------------------------------------------------
if __name__ == "__main__":
    B = 4                  # graphs batched per launch (parallel grid axis)
    N = 16                 # number of graph nodes
    input_dim = 16         # num_features
    hidden_dim = 32
    latent_dim = 8
    output_dim = input_dim
    gender_dim = 2

    key = jax.random.PRNGKey(0)
    k_x, k_eps, k_u, k_p = jax.random.split(key, 4)

    # node features per graph
    x = jax.random.normal(k_x, (B, N, input_dim), jnp.float32)

    # simple bidirectional ring graph (same topology for every batch element)
    idx = jnp.arange(N, dtype=jnp.int32)
    nxt = (idx + 1) % N
    edge_index = jnp.stack(
        [jnp.concatenate([idx, nxt]), jnp.concatenate([nxt, idx])], axis=0)
    a_hat = build_normalized_adjacency(edge_index, N)
    a_hat = jnp.broadcast_to(a_hat, (B, N, N))

    # noise (randn_like for reparameterize, rand_like for gumbel)
    eps = jax.random.normal(k_eps, (B, N, latent_dim), jnp.float32)
    u = jax.random.uniform(k_u, (B, N, gender_dim), jnp.float32)

    params = init_params(k_p, input_dim, hidden_dim, latent_dim,
                         output_dim, gender_dim)

    outs = gumbel_softmax_vae_forward(a_hat, x, eps, u, params)
    outs = jax.block_until_ready(outs)

    recon_x, gender, logits_label, mu, logvar, z = outs
    assert recon_x.shape == (B, N, output_dim)
    assert gender.shape == (B, N, gender_dim)
    assert logits_label.shape == (B, N, 1)
    assert mu.shape == (B, N, latent_dim)
    assert logvar.shape == (B, N, latent_dim)
    assert z.shape == (B, N, latent_dim)
    # hard gumbel output must be exactly one-hot rows
    assert bool(jnp.all(jnp.sum(gender, axis=-1) == 1.0))
    assert bool(jnp.all((gender == 0.0) | (gender == 1.0)))
    assert bool(jnp.all(jnp.isfinite(recon_x)))

    print("KERNEL_OK")
</pallas_src>

<mosaic_0001>
module attributes {stable_mosaic.version = 11 : i64} {
  func.func @kernel(%arg0: i32, %arg1: memref<1x16x16xbf16, #tpu.memory_space<vmem>>, %arg2: memref<1x16x384xf32, #tpu.memory_space<vmem>>, %arg3: memref<80x128xbf16, #tpu.memory_space<vmem>>, %arg4: memref<1x16x128xf32, #tpu.memory_space<vmem>>) attributes {dimension_semantics = [#tpu.dimension_semantics<parallel>], iteration_bounds = array<i64: 4>, scalar_prefetch = 0 : i64, scratch_operands = 0 : i64, tpu.core_type = #tpu.core_type<tc>, window_params = [{transform_indices = @transform_0, window_bounds = array<i64: 1, 16, 16>}, {transform_indices = @transform_1, window_bounds = array<i64: 1, 16, 384>}, {pipeline_mode = #tpu.pipeline_mode<synchronous>, transform_indices = @transform_2, window_bounds = array<i64: 80, 128>}, {transform_indices = @transform_3, window_bounds = array<i64: 1, 16, 128>}]} {
    %c0 = arith.constant 0 : index
    %c0_0 = arith.constant 0 : index
    %c0_1 = arith.constant 0 : index
    %0 = vector.load %arg1[%c0, %c0_0, %c0_1] : memref<1x16x16xbf16, #tpu.memory_space<vmem>>, vector<1x16x16xbf16>
    %1 = vector.shape_cast %0 : vector<1x16x16xbf16> to vector<16x16xbf16>
    %c0_2 = arith.constant 0 : index
    %c0_3 = arith.constant 0 : index
    %c0_4 = arith.constant 0 : index
    %2 = vector.load %arg2[%c0_2, %c0_3, %c0_4] : memref<1x16x384xf32, #tpu.memory_space<vmem>>, vector<1x16x16xf32>
    %3 = vector.shape_cast %2 : vector<1x16x16xf32> to vector<16x16xf32>
    %c0_5 = arith.constant 0 : index
    %c0_6 = arith.constant 0 : index
    %c128 = arith.constant 128 : index
    %4 = vector.load %arg2[%c0_5, %c0_6, %c128] : memref<1x16x384xf32, #tpu.memory_space<vmem>>, vector<1x16x8xf32>
    %5 = vector.shape_cast %4 : vector<1x16x8xf32> to vector<16x8xf32>
    %c0_7 = arith.constant 0 : index
    %c0_8 = arith.constant 0 : index
    %c256 = arith.constant 256 : index
    %6 = vector.load %arg2[%c0_7, %c0_8, %c256] : memref<1x16x384xf32, #tpu.memory_space<vmem>>, vector<1x16x2xf32>
    %7 = vector.shape_cast %6 : vector<1x16x2xf32> to vector<16x2xf32>
    %c0_9 = arith.constant 0 : index
    %c0_10 = arith.constant 0 : index
    %8 = vector.load %arg3[%c0_9, %c0_10] : memref<80x128xbf16, #tpu.memory_space<vmem>>, vector<16x32xbf16>
    %c16 = arith.constant 16 : index
    %c0_11 = arith.constant 0 : index
    %9 = vector.load %arg3[%c16, %c0_11] : memref<80x128xbf16, #tpu.memory_space<vmem>>, vector<32x16xbf16>
    %c48 = arith.constant 48 : index
    %c0_12 = arith.constant 0 : index
    %10 = vector.load %arg3[%c48, %c0_12] : memref<80x128xbf16, #tpu.memory_space<vmem>>, vector<8x18xbf16>
    %c56 = arith.constant 56 : index
    %c0_13 = arith.constant 0 : index
    %11 = vector.load %arg3[%c56, %c0_13] : memref<80x128xbf16, #tpu.memory_space<vmem>>, vector<8x1xbf16>
    %c64 = arith.constant 64 : index
    %c0_14 = arith.constant 0 : index
    %12 = vector.load %arg3[%c64, %c0_14] : memref<80x128xbf16, #tpu.memory_space<vmem>>, vector<1x32xbf16>
    %13 = arith.extf %12 : vector<1x32xbf16> to vector<1x32xf32>
    %c65 = arith.constant 65 : index
    %c0_15 = arith.constant 0 : index
    %14 = vector.load %arg3[%c65, %c0_15] : memref<80x128xbf16, #tpu.memory_space<vmem>>, vector<1x16xbf16>
    %15 = arith.extf %14 : vector<1x16xbf16> to vector<1x16xf32>
    %c66 = arith.constant 66 : index
    %c0_16 = arith.constant 0 : index
    %16 = vector.load %arg3[%c66, %c0_16] : memref<80x128xbf16, #tpu.memory_space<vmem>>, vector<1x18xbf16>
    %17 = arith.extf %16 : vector<1x18xbf16> to vector<1x18xf32>
    %c67 = arith.constant 67 : index
    %c0_17 = arith.constant 0 : index
    %18 = vector.load %arg3[%c67, %c0_17] : memref<80x128xbf16, #tpu.memory_space<vmem>>, vector<1x1xbf16>
    %19 = arith.extf %18 : vector<1x1xbf16> to vector<1x1xf32>
    %20 = arith.truncf %3 : vector<16x16xf32> to vector<16x16xbf16>
    %cst = arith.constant dense<0.000000e+00> : vector<16x16xf32>
    %21 = tpu.matmul %1, %20, %cst {dimension_numbers = #tpu.dot_dimension_numbers<[1], [0], [0], [1], [0, 0, 1, 1], [], []>} : vector<16x16xbf16>, vector<16x16xbf16>, vector<16x16xf32> -> vector<16x16xf32>
    %22 = arith.truncf %21 : vector<16x16xf32> to vector<16x16xbf16>
    %cst_18 = arith.constant dense<0.000000e+00> : vector<16x32xf32>
    %23 = tpu.matmul %22, %8, %cst_18 {dimension_numbers = #tpu.dot_dimension_numbers<[1], [0], [0], [1], [0, 0, 1, 1], [], []>} : vector<16x16xbf16>, vector<16x32xbf16>, vector<16x32xf32> -> vector<16x32xf32>
    %24 = vector.broadcast %13 : vector<1x32xf32> to vector<16x32xf32>
    %25 = arith.addf %23, %24 : vector<16x32xf32>
    %cst_19 = arith.constant 0.000000e+00 : f32
    %26 = vector.broadcast %cst_19 : f32 to vector<16x32xf32>
    %27 = arith.maximumf %25, %26 : vector<16x32xf32>
    %28 = arith.truncf %27 : vector<16x32xf32> to vector<16x32xbf16>
    %cst_20 = arith.constant dense<0.000000e+00> : vector<16x32xf32>
    %29 = tpu.matmul %1, %28, %cst_20 {dimension_numbers = #tpu.dot_dimension_numbers<[1], [0], [0], [1], [0, 0, 1, 1], [], []>} : vector<16x16xbf16>, vector<16x32xbf16>, vector<16x32xf32> -> vector<16x32xf32>
    %30 = arith.truncf %29 : vector<16x32xf32> to vector<16x32xbf16>
    %cst_21 = arith.constant dense<0.000000e+00> : vector<16x16xf32>
    %31 = tpu.matmul %30, %9, %cst_21 {dimension_numbers = #tpu.dot_dimension_numbers<[1], [0], [0], [1], [0, 0, 1, 1], [], []>} : vector<16x32xbf16>, vector<32x16xbf16>, vector<16x16xf32> -> vector<16x16xf32>
    %32 = vector.broadcast %15 : vector<1x16xf32> to vector<16x16xf32>
    %33 = arith.addf %31, %32 : vector<16x16xf32>
    %34 = vector.extract_strided_slice %33 {offsets = [0, 0], sizes = [16, 8], strides = [1, 1]} : vector<16x16xf32> to vector<16x8xf32>
    %35 = vector.extract_strided_slice %33 {offsets = [0, 8], sizes = [16, 8], strides = [1, 1]} : vector<16x16xf32> to vector<16x8xf32>
    %cst_22 = arith.constant 5.000000e-01 : f32
    %36 = vector.broadcast %cst_22 : f32 to vector<16x8xf32>
    %37 = arith.mulf %36, %35 : vector<16x8xf32>
    %38 = math.exp %37 : vector<16x8xf32>
    %39 = arith.mulf %5, %38 : vector<16x8xf32>
    %40 = arith.addf %39, %34 : vector<16x8xf32>
    %41 = arith.truncf %40 : vector<16x8xf32> to vector<16x8xbf16>
    %cst_23 = arith.constant dense<0.000000e+00> : vector<16x8xf32>
    %42 = tpu.matmul %1, %41, %cst_23 {dimension_numbers = #tpu.dot_dimension_numbers<[1], [0], [0], [1], [0, 0, 1, 1], [], []>} : vector<16x16xbf16>, vector<16x8xbf16>, vector<16x8xf32> -> vector<16x8xf32>
    %43 = arith.truncf %42 : vector<16x8xf32> to vector<16x8xbf16>
    %cst_24 = arith.constant dense<0.000000e+00> : vector<16x18xf32>
    %44 = tpu.matmul %43, %10, %cst_24 {dimension_numbers = #tpu.dot_dimension_numbers<[1], [0], [0], [1], [0, 0, 1, 1], [], []>} : vector<16x8xbf16>, vector<8x18xbf16>, vector<16x18xf32> -> vector<16x18xf32>
    %45 = vector.broadcast %17 : vector<1x18xf32> to vector<16x18xf32>
    %46 = arith.addf %44, %45 : vector<16x18xf32>
    %47 = vector.extract_strided_slice %46 {offsets = [0, 0], sizes = [16, 16], strides = [1, 1]} : vector<16x18xf32> to vector<16x16xf32>
    %48 = vector.extract_strided_slice %46 {offsets = [0, 16], sizes = [16, 2], strides = [1, 1]} : vector<16x18xf32> to vector<16x2xf32>
    %49 = arith.truncf %40 : vector<16x8xf32> to vector<16x8xbf16>
    %cst_25 = arith.constant dense<0.000000e+00> : vector<16x1xf32>
    %50 = tpu.matmul %49, %11, %cst_25 {dimension_numbers = #tpu.dot_dimension_numbers<[1], [0], [0], [1], [0, 0, 1, 1], [], []>} : vector<16x8xbf16>, vector<8x1xbf16>, vector<16x1xf32> -> vector<16x1xf32>
    %51 = vector.broadcast %19 : vector<1x1xf32> to vector<16x1xf32>
    %52 = arith.addf %50, %51 : vector<16x1xf32>
    %cst_26 = arith.constant 9.99999968E-21 : f32
    %53 = vector.broadcast %cst_26 : f32 to vector<16x2xf32>
    %54 = arith.addf %7, %53 : vector<16x2xf32>
    %55 = math.log %54 : vector<16x2xf32>
    %cst_27 = arith.constant 0.000000e+00 : f32
    %56 = vector.broadcast %cst_27 : f32 to vector<16x2xf32>
    %57 = arith.subf %56, %55 : vector<16x2xf32>
    %cst_28 = arith.constant 9.99999968E-21 : f32
    %58 = vector.broadcast %cst_28 : f32 to vector<16x2xf32>
    %59 = arith.addf %57, %58 : vector<16x2xf32>
    %60 = math.log %59 : vector<16x2xf32>
    %cst_29 = arith.constant 0.000000e+00 : f32
    %61 = vector.broadcast %cst_29 : f32 to vector<16x2xf32>
    %62 = arith.subf %61, %60 : vector<16x2xf32>
    %63 = arith.addf %48, %62 : vector<16x2xf32>
    %64 = vector.extract_strided_slice %63 {offsets = [0, 0], sizes = [16, 1], strides = [1, 1]} : vector<16x2xf32> to vector<16x1xf32>
    %65 = vector.extract_strided_slice %63 {offsets = [0, 1], sizes = [16, 1], strides = [1, 1]} : vector<16x2xf32> to vector<16x1xf32>
    %66 = arith.cmpf oge, %64, %65 : vector<16x1xf32>
    %67 = arith.extui %66 : vector<16x1xi1> to vector<16x1xi32>
    %68 = arith.sitofp %67 : vector<16x1xi32> to vector<16x1xf32>
    %cst_30 = arith.constant 1.000000e+00 : f32
    %69 = vector.broadcast %cst_30 : f32 to vector<16x1xf32>
    %70 = arith.subf %69, %68 : vector<16x1xf32>
    %71 = tpu.concatenate %68, %70 in 1 : vector<16x1xf32>, vector<16x1xf32> -> vector<16x2xf32>
    %cst_31 = arith.constant 0.000000e+00 : f32
    %72 = vector.broadcast %cst_31 : f32 to vector<16x85xf32>
    %73 = tpu.concatenate %47, %71, %52, %34, %35, %40, %72 in 1 : vector<16x16xf32>, vector<16x2xf32>, vector<16x1xf32>, vector<16x8xf32>, vector<16x8xf32>, vector<16x8xf32>, vector<16x85xf32> -> vector<16x128xf32>
    %c0_32 = arith.constant 0 : index
    %c0_33 = arith.constant 0 : index
    %c0_34 = arith.constant 0 : index
    %74 = vector.load %arg4[%c0_32, %c0_33, %c0_34] : memref<1x16x128xf32, #tpu.memory_space<vmem>>, vector<1x16x128xf32>
    %75 = vector.shape_cast %74 : vector<1x16x128xf32> to vector<16x128xf32>
    %76 = vector.shape_cast %73 : vector<16x128xf32> to vector<1x16x128xf32>
    tpu.vector_store %arg4[%c0_32, %c0_33, %c0_34], %76 {strides = array<i32>} : memref<1x16x128xf32, #tpu.memory_space<vmem>>, vector<1x16x128xf32>,
    return
  }
  func.func @transform_0(%arg0: i32) -> (i32, i32, i32) {
    %c0_i32 = arith.constant 0 : i32
    %c0_i32_0 = arith.constant 0 : i32
    %c0_i32_1 = arith.constant 0 : i32
    return %arg0, %c0_i32, %c0_i32_0 : i32, i32, i32
  }
  func.func @transform_1(%arg0: i32) -> (i32, i32, i32) {
    %c0_i32 = arith.constant 0 : i32
    %c0_i32_0 = arith.constant 0 : i32
    %c0_i32_1 = arith.constant 0 : i32
    return %arg0, %c0_i32, %c0_i32_0 : i32, i32, i32
  }
  func.func @transform_2(%arg0: i32) -> (i32, i32) {
    %c0_i32 = arith.constant 0 : i32
    %c0_i32_0 = arith.constant 0 : i32
    %c0_i32_1 = arith.constant 0 : i32
    return %c0_i32, %c0_i32_0 : i32, i32
  }
  func.func @transform_3(%arg0: i32) -> (i32, i32, i32) {
    %c0_i32 = arith.constant 0 : i32
    %c0_i32_0 = arith.constant 0 : i32
    %c0_i32_1 = arith.constant 0 : i32
    return %arg0, %c0_i32, %c0_i32_0 : i32, i32, i32
  }
}

</mosaic_0001>

<llo_original>
// kernel: tpu_custom_call.1
$region0: #{tpu_custom_call.1}
  #allocation0 [shape = 'u32[]', space=smem, size = 0x4, offset = 0x4, fixed_abs, tag = 'smem constant byte address 0x4 - core index']
  #allocation1 [shape = 'u32[144,128]{1,0:T(1,128)}', space=vmem, size = 0x12000, scoped, tag = 'internal scratch']
  %s0 = inlined_call_operand.hbm [shape: bf16[4,16,16], index: 0, kind: input, shape index: {}]
  %s1 = inlined_call_operand.hbm [shape: f32[4,16,384], index: 1, kind: input, shape index: {}]
  %s2 = inlined_call_operand.hbm [shape: bf16[80,128], index: 2, kind: input, shape index: {}]
  %s3 = inlined_call_operand.hbm [shape: f32[4,16,128], index: 3, kind: output, shape index: {}]
  %s4 = sld [smem:[#allocation0]]
  $region57: #{tpu_custom_call.1} parent=0
    _
  %s6 = ssub.s32 1, %s4
  %s7 = scalar_select 0, %s6, %s4
  $region1: #{tpu_custom_call.1} parent=0
    #allocation2 [shape = 'u8[8192]{0}', space=vmem, size = 0x2000, scoped, tag = 'input window, operand 0']
    #allocation3 [shape = 's32[2]{0}', space=sflag, size = 0x8, scoped, tag = 'scoped memory for tpu_custom_call.1']
    #allocation4 [shape = 's32[2]{0}', space=sflag, size = 0x8, scoped, tag = 'scoped memory for tpu_custom_call.1']
    #allocation5 [shape = 'u8[49152]{0}', space=vmem, size = 0xc000, scoped, tag = 'input window, operand 1']
    #allocation6 [shape = 's32[2]{0}', space=sflag, size = 0x8, scoped, tag = 'scoped memory for tpu_custom_call.1']
    #allocation7 [shape = 'u8[20480]{0}', space=vmem, size = 0x5000, scoped, tag = 'input window, operand 2, single buffered']
    #allocation8 [shape = 'u8[16384]{0}', space=vmem, size = 0x4000, scoped, tag = 'output window, operand 0']
    %8 = vsyncpa [#allocation3], 0
    %s9 = scalar_lea.sflag [#allocation3], 1
    %10 = vsyncpa %s9, 0
    %11 = vsyncpa [#allocation6], 0
    %s12 = scalar_lea.sflag [#allocation6], 1
    %13 = vsyncpa %s12, 0
    %14 = vsyncpa [#allocation4], 0
    %s15 = scalar_lea.sflag [#allocation4], 1
    %16 = vsyncpa %s15, 0
    loop: start=0, step=1, limit=6
    $region2: #{tpu_custom_call.1} parent=1 // loop_pre_header
      _
    $region3: #{tpu_custom_call.1} parent=1 // loop_header
      %s18 = sphi 0, %s22
      %p19 = scmp.ge.s32.totalorder %s18, 6
      %s28 = sphi 0, %s30
      %s31 = sphi 0, %s28
      %s32 = sphi 0, %s31
      %s48 = sphi 0, %s32
      %s54 = sphi 0, %s56
      %s57 = sphi 0, %s54
      %s58 = sphi 0, %s57
      %s74 = sphi 0, %s58
      %s78 = sphi 0, %s78
      %s80 = sphi 0, %s78
      %s81 = sphi 0, %s80
      %s95 = sphi 0, %s81
      %s101 = sphi 0, %s103
      %s104 = sphi 0, %s101
      %s105 = sphi 0, %s104
      %s121 = sphi 0, %s105
    $region4: #{tpu_custom_call.1} parent=1 // loop_header_branch
      %21 = sbr.rel (%p19) target = $region8
    $region5: #{tpu_custom_call.1} parent=1 // loop_body
      %s23 = ssub.s32 %s18, 1
      %s24 = ssub.s32 %s18, 2
      %s25 = sadd.s32 %s18, 1
      %s26 = ssub.s32 %s18, %s25
      %p27 = scmp.eq.s32.totalorder %s26, 0
      %s29 = sadd.s32 %s28, 1
      %s30 = scalar_select %p27, %s28, %s29
      %p33 = pneg %p27
      %p34 = scmp.eq.s32.totalorder %s18, 3
      %p35 = por %p33, %p34
      %p36 = scmp.ne.s32.totalorder %s28, %s31
      %p37 = scmp.eq.s32.totalorder %s18, 0
      %p38 = por %p36, %p37
      %p39 = scmp.ne.s32.totalorder %s28, %s31
      %p40 = scmp.eq.s32.totalorder %s23, 3
      %p41 = por %p39, %p40
      %p42 = scmp.ne.s32.totalorder %s31, %s32
      %p43 = scmp.eq.s32.totalorder %s23, 0
      %p44 = por %p42, %p43
      %p45 = scmp.ne.s32.totalorder %s31, %s32
      %p46 = scmp.eq.s32.totalorder %s24, 3
      %p47 = por %p45, %p46
      %p49 = scmp.ne.s32.totalorder %s32, %s48
      %p50 = scmp.eq.s32.totalorder %s24, 0
      %p51 = por %p49, %p50
      %s52 = ssub.s32 %s18, %s25
      %p53 = scmp.eq.s32.totalorder %s52, 0
      %s55 = sadd.s32 %s54, 1
      %s56 = scalar_select %p53, %s54, %s55
      %p59 = pneg %p53
      %p60 = scmp.eq.s32.totalorder %s18, 3
      %p61 = por %p59, %p60
      %p62 = scmp.ne.s32.totalorder %s54, %s57
      %p63 = scmp.eq.s32.totalorder %s18, 0
      %p64 = por %p62, %p63
      %p65 = scmp.ne.s32.totalorder %s54, %s57
      %p66 = scmp.eq.s32.totalorder %s23, 3
      %p67 = por %p65, %p66
      %p68 = scmp.ne.s32.totalorder %s57, %s58
      %p69 = scmp.eq.s32.totalorder %s23, 0
      %p70 = por %p68, %p69
      %p71 = scmp.ne.s32.totalorder %s57, %s58
      %p72 = scmp.eq.s32.totalorder %s24, 3
      %p73 = por %p71, %p72
      %p75 = scmp.ne.s32.totalorder %s58, %s74
      %p76 = scmp.eq.s32.totalorder %s24, 0
      %p77 = por %p75, %p76
      %s79 = sadd.s32 %s78, 1
      %p82 = scmp.eq.s32.totalorder %s18, 3
      %p83 = scmp.ne.s32.totalorder %s78, %s80
      %p84 = scmp.eq.s32.totalorder %s18, 0
      %p85 = por %p83, %p84
      %p86 = scmp.ne.s32.totalorder %s78, %s80
      %p87 = scmp.eq.s32.totalorder %s23, 3
      %p88 = por %p86, %p87
      %p89 = scmp.ne.s32.totalorder %s80, %s81
      %p90 = scmp.eq.s32.totalorder %s23, 0
      %p91 = por %p89, %p90
      %p92 = scmp.ne.s32.totalorder %s80, %s81
      %p93 = scmp.eq.s32.totalorder %s24, 3
      %p94 = por %p92, %p93
      %p96 = scmp.ne.s32.totalorder %s81, %s95
      %p97 = scmp.eq.s32.totalorder %s24, 0
      %p98 = por %p96, %p97
      %s99 = ssub.s32 %s18, %s25
      %p100 = scmp.eq.s32.totalorder %s99, 0
      %s102 = sadd.s32 %s101, 1
      %s103 = scalar_select %p100, %s101, %s102
      %p106 = pneg %p100
      %p107 = scmp.eq.s32.totalorder %s18, 3
      %p108 = por %p106, %p107
      %p109 = scmp.ne.s32.totalorder %s101, %s104
      %p110 = scmp.eq.s32.totalorder %s18, 0
      %p111 = por %p109, %p110
      %p112 = scmp.ne.s32.totalorder %s101, %s104
      %p113 = scmp.eq.s32.totalorder %s23, 3
      %p114 = por %p112, %p113
      %p115 = scmp.ne.s32.totalorder %s104, %s105
      %p116 = scmp.eq.s32.totalorder %s23, 0
      %p117 = por %p115, %p116
      %p118 = scmp.ne.s32.totalorder %s104, %s105
      %p119 = scmp.eq.s32.totalorder %s24, 3
      %p120 = por %p118, %p119
      %p122 = scmp.ne.s32.totalorder %s105, %s121
      %p123 = scmp.eq.s32.totalorder %s24, 0
      %p124 = por %p122, %p123
      %p125 = scmp.le.s32.totalorder 1, %s18
      %p126 = scmp.lt.s32.totalorder %s18, 5
      %p127 = pnand %p125, %p126
      %p128 = pneg %p127
      // Predicated region
      $region9: #{tpu_custom_call.1} parent=5 // pred_check
        _
      $region10: #{tpu_custom_call.1} parent=5 // pred_check_branch
        %130 = sbr.rel (%p127) target = $region12
      $region11: #{tpu_custom_call.1} parent=5 // pred_region
        %s131 = ssub.s32 %s18, 1
        // Predicated region
        $region13: #{tpu_custom_call.1} parent=11 // pred_check
          %p132 = pneg %p91
        $region14: #{tpu_custom_call.1} parent=11 // pred_check_branch
          %134 = sbr.rel (%p132) target = $region16
        $region15: #{tpu_custom_call.1} parent=11 // pred_region
          %s136 = ssub.s32 640, 640
          %137 = vsyncadd [#allocation6], %s136
          %s138 = sshll.u32 [#allocation7], 4
          %s139 = int_to_ptr.vmem [resolvable:$true] %s138
          %144 = dma.hbm_to_vmem [thread:$0]  %s2, 640, %s139, [#allocation6], 64, 64, 4
        $region16: #{tpu_custom_call.1} parent=11 // pred_fallthru
          _
      $region12: #{tpu_custom_call.1} parent=5 // pred_fallthru
        _
      %p145 = scmp.lt.s32.totalorder %s18, 4
      // Predicated region
      $region17: #{tpu_custom_call.1} parent=5 // pred_check
        %p146 = pneg %p145
      $region18: #{tpu_custom_call.1} parent=5 // pred_check_branch
        %148 = sbr.rel (%p146) target = $region20
      $region19: #{tpu_custom_call.1} parent=5 // pred_region
        // Predicated region
        $region21: #{tpu_custom_call.1} parent=19 // pred_check
          %p149 = pneg %p38
        $region22: #{tpu_custom_call.1} parent=19 // pred_check_branch
          %151 = sbr.rel (%p149) target = $region24
        $region23: #{tpu_custom_call.1} parent=19 // pred_region
          %s152 = sand.u32 %s28, 1
          %s153 = scalar_lea.sflag [#allocation3], %s152
          %s154 = sand.u32 %s28, 1
          %s155 = smul.addr %s154, 8
          %s156 = scalar_lea.vmem [#allocation2], %s155
          %s158 = ssub.s32 128, 128
          %159 = vsyncadd %s153, %s158
          %s160 = smul.addr %s18, 2
          %s161 = smul.addr %s160, 64
          %s162 = scalar_lea.hbm %s0, %s161
          %s163 = sshll.u32 %s156, 4
          %s164 = int_to_ptr.vmem [resolvable:$true] %s163
          %169 = dma.hbm_to_vmem [thread:$0]  %s162, 128, %s164, %s153, 64, 64, 4
        $region24: #{tpu_custom_call.1} parent=19 // pred_fallthru
          _
        // Predicated region
        $region25: #{tpu_custom_call.1} parent=19 // pred_check
          %p170 = pneg %p64
        $region26: #{tpu_custom_call.1} parent=19 // pred_check_branch
          %172 = sbr.rel (%p170) target = $region28
        $region27: #{tpu_custom_call.1} parent=19 // pred_region
          %s173 = sand.u32 %s18, 1
          %s174 = scalar_lea.sflag [#allocation6], %s173
          %s175 = sand.u32 %s54, 1
          %s176 = smul.addr %s175, 48
          %s177 = scalar_lea.vmem [#allocation5], %s176
          %s179 = ssub.s32 768, 768
          %180 = vsyncadd %s174, %s179
          %s181 = smul.addr %s18, 6
          %s182 = smul.addr %s181, 128
          %s183 = scalar_lea.hbm %s1, %s182
          %s184 = sshll.u32 %s177, 4
          %s185 = int_to_ptr.vmem [resolvable:$true] %s184
          %190 = dma.hbm_to_vmem [thread:$0]  %s183, 768, %s185, %s174, 384, 384, 24
        $region28: #{tpu_custom_call.1} parent=19 // pred_fallthru
          _
      $region20: #{tpu_custom_call.1} parent=5 // pred_fallthru
        _
      %p191 = scmp.le.s32.totalorder 1, %s18
      %p192 = scmp.lt.s32.totalorder %s18, 5
      %p193 = pnand %p191, %p192
      %p194 = pneg %p193
      // Predicated region
      $region29: #{tpu_custom_call.1} parent=5 // pred_check
        _
      $region30: #{tpu_custom_call.1} parent=5 // pred_check_branch
        %196 = sbr.rel (%p193) target = $region32
      $region31: #{tpu_custom_call.1} parent=5 // pred_region
        %s197 = ssub.s32 %s18, 1
        %s198 = sand.u32 %s31, 1
        %s199 = scalar_lea.sflag [#allocation3], %s198
        %s200 = sand.u32 %s31, 1
        %s201 = smul.addr %s200, 8
        %s202 = scalar_lea.vmem [#allocation2], %s201
        // Predicated region
        $region33: #{tpu_custom_call.1} parent=31 // pred_check
          %p203 = pneg %p44
        $region34: #{tpu_custom_call.1} parent=31 // pred_check_branch
          %205 = sbr.rel (%p203) target = $region36
        $region35: #{tpu_custom_call.1} parent=31 // pred_region
          %206 = dma.done %s199, 128
        $region36: #{tpu_custom_call.1} parent=31 // pred_fallthru
          _
        %s207 = sand.u32 %s23, 1
        %s208 = scalar_lea.sflag [#allocation6], %s207
        %s209 = sand.u32 %s57, 1
        %s210 = smul.addr %s209, 48
        %s211 = scalar_lea.vmem [#allocation5], %s210
        // Predicated region
        $region37: #{tpu_custom_call.1} parent=31 // pred_check
          %p212 = pneg %p70
        $region38: #{tpu_custom_call.1} parent=31 // pred_check_branch
          %214 = sbr.rel (%p212) target = $region40
        $region39: #{tpu_custom_call.1} parent=31 // pred_region
          %215 = dma.done %s208, 768
        $region40: #{tpu_custom_call.1} parent=31 // pred_fallthru
          _
        // Predicated region
        $region41: #{tpu_custom_call.1} parent=31 // pred_check
          %p216 = pneg %p91
        $region42: #{tpu_custom_call.1} parent=31 // pred_check_branch
          %218 = sbr.rel (%p216) target = $region44
        $region43: #{tpu_custom_call.1} parent=31 // pred_region
          %219 = dma.done [#allocation6], 640
        $region44: #{tpu_custom_call.1} parent=31 // pred_fallthru
          _
        %s220 = sand.u32 %s31, 1
        %s221 = scalar_lea.sflag [#allocation3], %s220
        %s222 = sand.u32 %s31, 1
        %s223 = smul.addr %s222, 8
        %s224 = scalar_lea.vmem [#allocation2], %s223
        %p225 = pneg %p44
        %p226 = pneg %p41
        %s227 = sand.u32 %s23, 1
        %s228 = scalar_lea.sflag [#allocation6], %s227
        %s229 = sand.u32 %s57, 1
        %s230 = smul.addr %s229, 48
        %s231 = scalar_lea.vmem [#allocation5], %s230
        %p232 = pneg %p70
        %p233 = pneg %p67
        %p234 = pneg %p91
        %p235 = pneg %p88
        %p236 = pneg %p117
        %p237 = pneg %p114
        %s238 = sand.u32 %s104, 1
        %s239 = scalar_lea.sflag [#allocation4], %s238
        %s240 = sand.u32 %s104, 1
        %s241 = smul.addr %s240, 16
        %s242 = scalar_lea.vmem [#allocation8], %s241
        %v244 = vld [vmem:[%s202] sm:$0xf]
        %v245 = vld [vmem:[%s202 + $0x4] sm:$0xf]
        %v246 = vld [vmem:[%s211] sm:$0xff]
        %v247 = vld [vmem:[%s211 + $0x18] sm:$0xff]
        %v248 = vld [vmem:[%s211 + $0x8] sm:$0xff]
        %v249 = vld [vmem:[%s211 + $0x20] sm:$0xff]
        %v250 = vld [vmem:[%s211 + $0x10] sm:$0xff]
        %v251 = vld [vmem:[%s211 + $0x28] sm:$0xff]
        %v252 = vld [vmem:[#allocation7] sm:$0xf]
        %v253 = vld [vmem:[#allocation7 + $0x4] sm:$0xf]
        %v254 = vld [vmem:[#allocation7 + $0x8] sm:$0xf]
        %v255 = vld [vmem:[#allocation7 + $0xc] sm:$0xf]
        %v256 = vld [vmem:[#allocation7 + $0x10] sm:$0xf]
        %v257 = vld [vmem:[#allocation7 + $0x14] sm:$0xf]
        %v258 = vld [vmem:[#allocation7 + $0x18] sm:$0xf]
        %v259 = vld [vmem:[#allocation7 + $0x1c] sm:$0xf]
        %v260 = vld [vmem:[#allocation7 + $0x20] sm:$0x1]
        %v261 = vunpack.c.l.bf16 %v260
        %v262 = vld [vmem:[#allocation7 + $0x20] sm:$0x2]
        %v263 = vunpack.c.l.bf16 %v262
        %v264 = vpack.c.bf16 %v247, %v246
        %v267 = vunpack.c.l.b16 %v244
        %v268 = vunpack.c.l.b16 %v245
        %v269 = vpack.c.b16 %v268, %v267
        %vm270 = vcmask 130048
        %v272 = vsel %vm270, %v269, 0
        %274 = vmatprep.subr.bf16.mxu0 0
        %275 = vmatpush1.bf16.msra.mxu0 %v264
        %276 = vmatprep.subr.bf16.mxu0 0
        %277 = vmatpush1.bf16.msra.mxu0 0
        %278 = vmatprep.subr.bf16.mxu0 0
        %279 = vmatpush1.bf16.msra.mxu0 0
        %280 = vmatprep.subr.bf16.mxu0 0
        %281 = vmatpush1.bf16.msra.mxu0 0
        %282 = vmatprep.subr.bf16.mxu0 0
        %283 = vmatpush1.bf16.msra.mxu0 0
        %284 = vmatprep.subr.bf16.mxu0 0
        %285 = vmatpush1.bf16.msra.mxu0 0
        %286 = vmatprep.subr.bf16.mxu0 0
        %287 = vmatpush1.bf16.msra.mxu0 0
        %288 = vmatprep.subr.bf16.mxu0 0
        %289 = vmatpush1.bf16.msra.mxu0 0
        %290 = vmatprep.subr.bf16.mxu0 0
        %291 = vmatpush1.bf16.msra.mxu0 0
        %292 = vmatprep.subr.bf16.mxu0 0
        %293 = vmatpush1.bf16.msra.mxu0 0
        %294 = vmatprep.subr.bf16.mxu0 0
        %295 = vmatpush1.bf16.msra.mxu0 0
        %296 = vmatprep.subr.bf16.mxu0 0
        %297 = vmatpush1.bf16.msra.mxu0 0
        %298 = vmatprep.subr.bf16.mxu0 0
        %299 = vmatpush1.bf16.msra.mxu0 0
        %300 = vmatprep.subr.bf16.mxu0 0
        %301 = vmatpush1.bf16.msra.mxu0 0
        %302 = vmatprep.subr.bf16.mxu0 0
        %303 = vmatpush1.bf16.msra.mxu0 0
        %304 = vmatprep.subr.bf16.mxu0 0
        %305 = vmatpush1.bf16.msra.mxu0 0
        %306 = vmatprep.mubr.bf16.mxu0 0
        %307 = vmatmul.mubr.bf16.gmra.mrb[0].mxu0 %v272
        %v308 = vpop.f32.mrb[0].mxu0
        %v309 = vadd.f32 0.0, %v308
        %v310 = vpop.f32.mrb[0].mxu0
        %v311 = vpop.f32.mrb[0].mxu0
        %v312 = vadd.f32 0.0, %v311
        %v313 = vpop.f32.mrb[0].mxu0
        %314 = vdwg.mxu0
        %v315 = vpack.c.bf16 %v312, %v309
        %v316 = vlaneseq
        %v317 = vshrl.u32 %v316, 7
        %v318 = vsub.s32 0, %v317
        %v319 = vrot.slane %v261, %v318
        %v322 = vunpack.c.l.b16 %v252
        %v323 = vunpack.c.l.b16 %v253
        %v324 = vpack.c.b16 %v323, %v322
        %v327 = vsel %vm270, %v315, 0
        %329 = vmatprep.subr.bf16.mxu0 0
        %330 = vmatpush1.bf16.msra.mxu0 %v324
        %331 = vmatprep.subr.bf16.mxu0 0
        %332 = vmatpush1.bf16.msra.mxu0 0
        %333 = vmatprep.subr.bf16.mxu0 0
        %334 = vmatpush1.bf16.msra.mxu0 0
        %335 = vmatprep.subr.bf16.mxu0 0
        %336 = vmatpush1.bf16.msra.mxu0 0
        %337 = vmatprep.subr.bf16.mxu0 0
        %338 = vmatpush1.bf16.msra.mxu0 0
        %339 = vmatprep.subr.bf16.mxu0 0
        %340 = vmatpush1.bf16.msra.mxu0 0
        %341 = vmatprep.subr.bf16.mxu0 0
        %342 = vmatpush1.bf16.msra.mxu0 0
        %343 = vmatprep.subr.bf16.mxu0 0
        %344 = vmatpush1.bf16.msra.mxu0 0
        %345 = vmatprep.subr.bf16.mxu0 0
        %346 = vmatpush1.bf16.msra.mxu0 0
        %347 = vmatprep.subr.bf16.mxu0 0
        %348 = vmatpush1.bf16.msra.mxu0 0
        %349 = vmatprep.subr.bf16.mxu0 0
        %350 = vmatpush1.bf16.msra.mxu0 0
        %351 = vmatprep.subr.bf16.mxu0 0
        %352 = vmatpush1.bf16.msra.mxu0 0
        %353 = vmatprep.subr.bf16.mxu0 0
        %354 = vmatpush1.bf16.msra.mxu0 0
        %355 = vmatprep.subr.bf16.mxu0 0
        %356 = vmatpush1.bf16.msra.mxu0 0
        %357 = vmatprep.subr.bf16.mxu0 0
        %358 = vmatpush1.bf16.msra.mxu0 0
        %359 = vmatprep.subr.bf16.mxu0 0
        %360 = vmatpush1.bf16.msra.mxu0 0
        %361 = vmatprep.mubr.bf16.mxu0 0
        %362 = vmatmul.mubr.bf16.gmra.mrb[0].mxu0 %v327
        %v363 = vpop.f32.mrb[0].mxu0
        %v364 = vadd.f32 %v319, %v363
        %v365 = vpop.f32.mrb[0].mxu0
        %v366 = vpop.f32.mrb[0].mxu0
        %v367 = vadd.f32 %v319, %v366
        %v368 = vpop.f32.mrb[0].mxu0
        %369 = vdwg.mxu0
        %v370 = vmax.f32 %v364, 0.0
        %v371 = vmax.f32 %v367, 0.0
        %v372 = vpack.c.bf16 %v371, %v370
        %373 = vmatprep.subr.bf16.mxu0 0
        %374 = vmatpush1.bf16.msra.mxu0 %v372
        %375 = vmatprep.subr.bf16.mxu0 0
        %376 = vmatpush1.bf16.msra.mxu0 0
        %377 = vmatprep.subr.bf16.mxu0 0
        %378 = vmatpush1.bf16.msra.mxu0 0
        %379 = vmatprep.subr.bf16.mxu0 0
        %380 = vmatpush1.bf16.msra.mxu0 0
        %381 = vmatprep.subr.bf16.mxu0 0
        %382 = vmatpush1.bf16.msra.mxu0 0
        %383 = vmatprep.subr.bf16.mxu0 0
        %384 = vmatpush1.bf16.msra.mxu0 0
        %385 = vmatprep.subr.bf16.mxu0 0
        %386 = vmatpush1.bf16.msra.mxu0 0
        %387 = vmatprep.subr.bf16.mxu0 0
        %388 = vmatpush1.bf16.msra.mxu0 0
        %389 = vmatprep.subr.bf16.mxu0 0
        %390 = vmatpush1.bf16.msra.mxu0 0
        %391 = vmatprep.subr.bf16.mxu0 0
        %392 = vmatpush1.bf16.msra.mxu0 0
        %393 = vmatprep.subr.bf16.mxu0 0
        %394 = vmatpush1.bf16.msra.mxu0 0
        %395 = vmatprep.subr.bf16.mxu0 0
        %396 = vmatpush1.bf16.msra.mxu0 0
        %397 = vmatprep.subr.bf16.mxu0 0
        %398 = vmatpush1.bf16.msra.mxu0 0
        %399 = vmatprep.subr.bf16.mxu0 0
        %400 = vmatpush1.bf16.msra.mxu0 0
        %401 = vmatprep.subr.bf16.mxu0 0
        %402 = vmatpush1.bf16.msra.mxu0 0
        %403 = vmatprep.subr.bf16.mxu0 0
        %404 = vmatpush1.bf16.msra.mxu0 0
        %405 = vmatprep.mubr.bf16.mxu0 0
        %406 = vmatmul.mubr.bf16.gmra.mrb[0].mxu0 %v272
        %v407 = vpop.f32.mrb[0].mxu0
        %v408 = vadd.f32 0.0, %v407
        %v409 = vpop.f32.mrb[0].mxu0
        %v410 = vpop.f32.mrb[0].mxu0
        %v411 = vadd.f32 0.0, %v410
        %v412 = vpop.f32.mrb[0].mxu0
        %413 = vdwg.mxu0
        %v414 = vpack.c.bf16 %v411, %v408
        %v415 = vlaneseq
        %v416 = vshrl.u32 %v415, 7
        %v417 = vsub.s32 1, %v416
        %v418 = vrot.slane %v261, %v417
        %v423 = vunpack.c.l.b16 %v254
        %v424 = vunpack.c.l.b16 %v255
        %v425 = vunpack.c.l.b16 %v256
        %v426 = vunpack.c.l.b16 %v257
        %v427 = vpack.c.b16 %v424, %v423
        %v428 = vpack.c.b16 %v426, %v425
        %vm431 = vcmask 261120
        %v433 = vsel %vm431, %v414, 0
        %435 = vmatprep.subr.bf16.mxu0 0
        %436 = vmatpush1.bf16.msra.mxu0 %v427
        %437 = vmatprep.subr.bf16.mxu0 0
        %438 = vmatpush1.bf16.msra.mxu0 %v428
        %439 = vmatprep.subr.bf16.mxu0 0
        %440 = vmatpush1.bf16.msra.mxu0 0
        %441 = vmatprep.subr.bf16.mxu0 0
        %442 = vmatpush1.bf16.msra.mxu0 0
        %443 = vmatprep.subr.bf16.mxu0 0
        %444 = vmatpush1.bf16.msra.mxu0 0
        %445 = vmatprep.subr.bf16.mxu0 0
        %446 = vmatpush1.bf16.msra.mxu0 0
        %447 = vmatprep.subr.bf16.mxu0 0
        %448 = vmatpush1.bf16.msra.mxu0 0
        %449 = vmatprep.subr.bf16.mxu0 0
        %450 = vmatpush1.bf16.msra.mxu0 0
        %451 = vmatprep.subr.bf16.mxu0 0
        %452 = vmatpush1.bf16.msra.mxu0 0
        %453 = vmatprep.subr.bf16.mxu0 0
        %454 = vmatpush1.bf16.msra.mxu0 0
        %455 = vmatprep.subr.bf16.mxu0 0
        %456 = vmatpush1.bf16.msra.mxu0 0
        %457 = vmatprep.subr.bf16.mxu0 0
        %458 = vmatpush1.bf16.msra.mxu0 0
        %459 = vmatprep.subr.bf16.mxu0 0
        %460 = vmatpush1.bf16.msra.mxu0 0
        %461 = vmatprep.subr.bf16.mxu0 0
        %462 = vmatpush1.bf16.msra.mxu0 0
        %463 = vmatprep.subr.bf16.mxu0 0
        %464 = vmatpush1.bf16.msra.mxu0 0
        %465 = vmatprep.subr.bf16.mxu0 0
        %466 = vmatpush1.bf16.msra.mxu0 0
        %467 = vmatprep.mubr.bf16.mxu0 0
        %468 = vmatmul.mubr.bf16.gmra.mrb[0].mxu0 %v433
        %v469 = vpop.f32.mrb[0].mxu0
        %v470 = vadd.f32 %v418, %v469
        %v471 = vpop.f32.mrb[0].mxu0
        %v472 = vpop.f32.mrb[0].mxu0
        %v473 = vadd.f32 %v418, %v472
        %v474 = vpop.f32.mrb[0].mxu0
        %475 = vdwg.mxu0
        %v476 = vmul.f32 %v470, 0.5
        %v477 = vmul.f32 %v473, 0.5
        %v478 = vmul.f32 %v476, 1.442695
        %v479 = vpow.pop %v478
        %v480 = vmul.f32 %v477, 1.442695
        %v481 = vpow.pop %v480
        %484 = vrot.lane.b32.xlu0 %v479, 120
        %v485 = vpop.permute.xlu0 %484
        %486 = vrot.lane.b32.xlu0 %v481, 120
        %v487 = vpop.permute.xlu0 %486
        %v490 = vmul.f32 %v248, %v485
        %v491 = vmul.f32 %v249, %v487
        %v492 = vadd.f32 %v490, %v470
        %v493 = vadd.f32 %v491, %v473
        %v494 = vpack.c.bf16 %v493, %v492
        %495 = vmatprep.subr.bf16.mxu0 0
        %496 = vmatpush1.bf16.msra.mxu0 %v494
        %497 = vmatprep.subr.bf16.mxu0 0
        %498 = vmatpush1.bf16.msra.mxu0 0
        %499 = vmatprep.subr.bf16.mxu0 0
        %500 = vmatpush1.bf16.msra.mxu0 0
        %501 = vmatprep.subr.bf16.mxu0 0
        %502 = vmatpush1.bf16.msra.mxu0 0
        %503 = vmatprep.subr.bf16.mxu0 0
        %504 = vmatpush1.bf16.msra.mxu0 0
        %505 = vmatprep.subr.bf16.mxu0 0
        %506 = vmatpush1.bf16.msra.mxu0 0
        %507 = vmatprep.subr.bf16.mxu0 0
        %508 = vmatpush1.bf16.msra.mxu0 0
        %509 = vmatprep.subr.bf16.mxu0 0
        %510 = vmatpush1.bf16.msra.mxu0 0
        %511 = vmatprep.subr.bf16.mxu0 0
        %512 = vmatpush1.bf16.msra.mxu0 0
        %513 = vmatprep.subr.bf16.mxu0 0
        %514 = vmatpush1.bf16.msra.mxu0 0
        %515 = vmatprep.subr.bf16.mxu0 0
        %516 = vmatpush1.bf16.msra.mxu0 0
        %517 = vmatprep.subr.bf16.mxu0 0
        %518 = vmatpush1.bf16.msra.mxu0 0
        %519 = vmatprep.subr.bf16.mxu0 0
        %520 = vmatpush1.bf16.msra.mxu0 0
        %521 = vmatprep.subr.bf16.mxu0 0
        %522 = vmatpush1.bf16.msra.mxu0 0
        %523 = vmatprep.subr.bf16.mxu0 0
        %524 = vmatpush1.bf16.msra.mxu0 0
        %525 = vmatprep.subr.bf16.mxu0 0
        %526 = vmatpush1.bf16.msra.mxu0 0
        %527 = vmatprep.mubr.bf16.mxu0 0
        %528 = vmatmul.mubr.bf16.gmra.mrb[0].mxu0 %v272
        %v529 = vpop.f32.mrb[0].mxu0
        %v530 = vadd.f32 0.0, %v529
        %v531 = vpop.f32.mrb[0].mxu0
        %v532 = vpop.f32.mrb[0].mxu0
        %v533 = vadd.f32 0.0, %v532
        %v534 = vpop.f32.mrb[0].mxu0
        %535 = vdwg.mxu0
        %v536 = vpack.c.bf16 %v533, %v530
        %v537 = vlaneseq
        %v538 = vshrl.u32 %v537, 7
        %v539 = vsub.s32 2, %v538
        %v540 = vrot.slane %v263, %v539
        %vm541 = vcmask 64512
        %v543 = vsel %vm541, %v536, 0
        %vm545 = vcmask 1043456
        %v547 = vsel %vm545, %v258, 0
        %549 = vmatprep.subr.bf16.mxu0 0
        %550 = vmatpush1.bf16.msra.mxu0 %v547
        %551 = vmatprep.subr.bf16.mxu0 0
        %552 = vmatpush1.bf16.msra.mxu0 0
        %553 = vmatprep.subr.bf16.mxu0 0
        %554 = vmatpush1.bf16.msra.mxu0 0
        %555 = vmatprep.subr.bf16.mxu0 0
        %556 = vmatpush1.bf16.msra.mxu0 0
        %557 = vmatprep.subr.bf16.mxu0 0
        %558 = vmatpush1.bf16.msra.mxu0 0
        %559 = vmatprep.subr.bf16.mxu0 0
        %560 = vmatpush1.bf16.msra.mxu0 0
        %561 = vmatprep.subr.bf16.mxu0 0
        %562 = vmatpush1.bf16.msra.mxu0 0
        %563 = vmatprep.subr.bf16.mxu0 0
        %564 = vmatpush1.bf16.msra.mxu0 0
        %565 = vmatprep.subr.bf16.mxu0 0
        %566 = vmatpush1.bf16.msra.mxu0 0
        %567 = vmatprep.subr.bf16.mxu0 0
        %568 = vmatpush1.bf16.msra.mxu0 0
        %569 = vmatprep.subr.bf16.mxu0 0
        %570 = vmatpush1.bf16.msra.mxu0 0
        %571 = vmatprep.subr.bf16.mxu0 0
        %572 = vmatpush1.bf16.msra.mxu0 0
        %573 = vmatprep.subr.bf16.mxu0 0
        %574 = vmatpush1.bf16.msra.mxu0 0
        %575 = vmatprep.subr.bf16.mxu0 0
        %576 = vmatpush1.bf16.msra.mxu0 0
        %577 = vmatprep.subr.bf16.mxu0 0
        %578 = vmatpush1.bf16.msra.mxu0 0
        %579 = vmatprep.subr.bf16.mxu0 0
        %580 = vmatpush1.bf16.msra.mxu0 0
        %581 = vmatprep.mubr.bf16.mxu0 0
        %582 = vmatmul.mubr.bf16.gmra.mrb[0].mxu0 %v543
        %v583 = vpop.f32.mrb[0].mxu0
        %v584 = vadd.f32 %v540, %v583
        %v585 = vpop.f32.mrb[0].mxu0
        %v586 = vpop.f32.mrb[0].mxu0
        %v587 = vadd.f32 %v540, %v586
        %v588 = vpop.f32.mrb[0].mxu0
        %589 = vdwg.mxu0
        %v590 = vlaneseq
        %v591 = vshrl.u32 %v590, 7
        %v592 = vsub.s32 3, %v591
        %v593 = vrot.slane %v263, %v592
        %v595 = vsel %vm541, %v494, 0
        %v598 = vsel %vm545, %v259, 0
        %600 = vmatprep.subr.bf16.mxu0 0
        %601 = vmatpush1.bf16.msra.mxu0 %v598
        %602 = vmatprep.subr.bf16.mxu0 0
        %603 = vmatpush1.bf16.msra.mxu0 0
        %604 = vmatprep.subr.bf16.mxu0 0
        %605 = vmatpush1.bf16.msra.mxu0 0
        %606 = vmatprep.subr.bf16.mxu0 0
        %607 = vmatpush1.bf16.msra.mxu0 0
        %608 = vmatprep.subr.bf16.mxu0 0
        %609 = vmatpush1.bf16.msra.mxu0 0
        %610 = vmatprep.subr.bf16.mxu0 0
        %611 = vmatpush1.bf16.msra.mxu0 0
        %612 = vmatprep.subr.bf16.mxu0 0
        %613 = vmatpush1.bf16.msra.mxu0 0
        %614 = vmatprep.subr.bf16.mxu0 0
        %615 = vmatpush1.bf16.msra.mxu0 0
        %616 = vmatprep.subr.bf16.mxu0 0
        %617 = vmatpush1.bf16.msra.mxu0 0
        %618 = vmatprep.subr.bf16.mxu0 0
        %619 = vmatpush1.bf16.msra.mxu0 0
        %620 = vmatprep.subr.bf16.mxu0 0
        %621 = vmatpush1.bf16.msra.mxu0 0
        %622 = vmatprep.subr.bf16.mxu0 0
        %623 = vmatpush1.bf16.msra.mxu0 0
        %624 = vmatprep.subr.bf16.mxu0 0
        %625 = vmatpush1.bf16.msra.mxu0 0
        %626 = vmatprep.subr.bf16.mxu0 0
        %627 = vmatpush1.bf16.msra.mxu0 0
        %628 = vmatprep.subr.bf16.mxu0 0
        %629 = vmatpush1.bf16.msra.mxu0 0
        %630 = vmatprep.subr.bf16.mxu0 0
        %631 = vmatpush1.bf16.msra.mxu0 0
        %632 = vmatprep.mubr.bf16.mxu0 0
        %633 = vmatmul.mubr.bf16.gmra.mrb[0].mxu0 %v595
        %v634 = vpop.f32.mrb[0].mxu0
        %v635 = vadd.f32 %v593, %v634
        %v636 = vpop.f32.mrb[0].mxu0
        %v637 = vpop.f32.mrb[0].mxu0
        %v638 = vadd.f32 %v593, %v637
        %v639 = vpop.f32.mrb[0].mxu0
        %640 = vdwg.mxu0
        %v641 = vadd.f32 %v250, 1e-20
        %v642 = vadd.f32 %v251, 1e-20
        %v643 = vlog2.pop %v641
        %v644 = vmul.f32 %v643, 0.6931472
        %v645 = vlog2.pop %v642
        %v646 = vmul.f32 %v645, 0.6931472
        %v647 = vsub.f32 0.0, %v644
        %v648 = vsub.f32 0.0, %v646
        %v649 = vadd.f32 %v647, 1e-20
        %v650 = vadd.f32 %v648, 1e-20
        %v651 = vlog2.pop %v649
        %v652 = vmul.f32 %v651, 0.6931472
        %v653 = vlog2.pop %v650
        %v654 = vmul.f32 %v653, 0.6931472
        %v655 = vsub.f32 0.0, %v652
        %v656 = vsub.f32 0.0, %v654
        %659 = vrot.lane.b32.xlu0 %v655, 16
        %v660 = vpop.permute.xlu0 %659
        %661 = vrot.lane.b32.xlu0 %v656, 16
        %v662 = vpop.permute.xlu0 %661
        %v665 = vadd.f32 %v584, %v660
        %v666 = vadd.f32 %v587, %v662
        %669 = vrot.lane.b32.xlu0 %v665, 127
        %v670 = vpop.permute.xlu0 %669
        %671 = vrot.lane.b32.xlu0 %v666, 127
        %v672 = vpop.permute.xlu0 %671
        %vm675 = vcmp.ge.f32.partialorder %v665, %v670
        %vm676 = vcmp.ge.f32.partialorder %v666, %v672
        %v677 = vsel %vm675, 1, 0
        %v678 = vsel %vm676, 1, 0
        %v679 = vcvt.s32.f32 %v677
        %v680 = vcvt.s32.f32 %v678
        %v681 = vsub.f32 1.0, %v679
        %v682 = vsub.f32 1.0, %v680
        %685 = vrot.lane.b32.xlu0 %v679, 112
        %v686 = vpop.permute.xlu0 %685
        %687 = vrot.lane.b32.xlu0 %v680, 112
        %v688 = vpop.permute.xlu0 %687
        %693 = vrot.lane.b32.xlu0 %v681, 113
        %v694 = vpop.permute.xlu0 %693
        %695 = vrot.lane.b32.xlu0 %v682, 113
        %v696 = vpop.permute.xlu0 %695
        %vm699 = vcmask 7168
        %v700 = vsel %vm699, %v686, %v694
        %v701 = vsel %vm699, %v688, %v696
        %704 = vrot.lane.b32.xlu0 %v700, 16
        %v705 = vpop.permute.xlu0 %704
        %706 = vrot.lane.b32.xlu0 %v701, 16
        %v707 = vpop.permute.xlu0 %706
        %712 = vrot.lane.b32.xlu0 %v635, 18
        %v713 = vpop.permute.xlu0 %712
        %714 = vrot.lane.b32.xlu0 %v638, 18
        %v715 = vpop.permute.xlu0 %714
        %720 = vrot.lane.b32.xlu0 %v470, 19
        %v721 = vpop.permute.xlu0 %720
        %722 = vrot.lane.b32.xlu0 %v473, 19
        %v723 = vpop.permute.xlu0 %722
        %728 = vrot.lane.b32.xlu0 %v492, 35
        %v729 = vpop.permute.xlu0 %728
        %730 = vrot.lane.b32.xlu0 %v493, 35
        %v731 = vpop.permute.xlu0 %730
        %v734 = vsel %vm270, %v584, %v705
        %v735 = vsel %vm270, %v587, %v707
        %vm736 = vcmask 146432
        %v737 = vsel %vm736, %v734, %v713
        %v738 = vsel %vm736, %v735, %v715
        %vm739 = vcmask 154624
        %v740 = vsel %vm739, %v737, %v721
        %v741 = vsel %vm739, %v738, %v723
        %vm742 = vcmask 220160
        %v743 = vsel %vm742, %v740, %v721
        %v744 = vsel %vm742, %v741, %v723
        %vm745 = vcmask 285696
        %v746 = vsel %vm745, %v743, %v729
        %v747 = vsel %vm745, %v744, %v731
        %vm748 = vcmask 351232
        %v749 = vsel %vm748, %v746, 0.0
        %v750 = vsel %vm748, %v747, 0.0
        %751 = vst [vmem:[%s242] sm:$0xff] %v749
        %752 = vst [vmem:[%s242 + $0x8] sm:$0xff] %v750
        %s753 = sand.u32 %s104, 1
        %s754 = scalar_lea.sflag [#allocation4], %s753
        %s755 = sand.u32 %s104, 1
        %s756 = smul.addr %s755, 16
        %s757 = scalar_lea.vmem [#allocation8], %s756
        // Predicated region
        $region45: #{tpu_custom_call.1} parent=31 // pred_check
          %p758 = pneg %p114
        $region46: #{tpu_custom_call.1} parent=31 // pred_check_branch
          %760 = sbr.rel (%p758) target = $region48
        $region47: #{tpu_custom_call.1} parent=31 // pred_region
          %s762 = ssub.s32 256, 256
          %763 = vsyncadd %s754, %s762
          %s764 = smul.addr %s23, 2
          %s765 = smul.addr %s764, 128
          %s766 = scalar_lea.hbm %s3, %s765
          %s767 = sshll.u32 %s757, 4
          %s768 = int_to_ptr.vmem [resolvable:$true] %s767
          %773 = dma.vmem_to_hbm [thread:$0]  %s768, 256, %s766, %s754, 128, 128, 8
        $region48: #{tpu_custom_call.1} parent=31 // pred_fallthru
          _
      $region32: #{tpu_custom_call.1} parent=5 // pred_fallthru
        _
      %p774 = scmp.le.s32.totalorder 2, %s18
      // Predicated region
      $region49: #{tpu_custom_call.1} parent=5 // pred_check
        %p775 = pneg %p774
      $region50: #{tpu_custom_call.1} parent=5 // pred_check_branch
        %777 = sbr.rel (%p775) target = $region52
      $region51: #{tpu_custom_call.1} parent=5 // pred_region
        %s778 = ssub.s32 %s18, 2
        // Predicated region
        $region53: #{tpu_custom_call.1} parent=51 // pred_check
          %p779 = pneg %p120
        $region54: #{tpu_custom_call.1} parent=51 // pred_check_branch
          %781 = sbr.rel (%p779) target = $region56
        $region55: #{tpu_custom_call.1} parent=51 // pred_region
          %s782 = sand.u32 %s105, 1
          %s783 = scalar_lea.sflag [#allocation4], %s782
          %s784 = sand.u32 %s105, 1
          %s785 = smul.addr %s784, 16
          %s786 = scalar_lea.vmem [#allocation8], %s785
          %787 = dma.done %s783, 256
        $region56: #{tpu_custom_call.1} parent=51 // pred_fallthru
          _
      $region52: #{tpu_custom_call.1} parent=5 // pred_fallthru
        _
    $region6: #{tpu_custom_call.1} parent=1 // loop_footer
      %s22 = sadd.s32 1, %s18
    $region7: #{tpu_custom_call.1} parent=1 // loop_footer_branch
      %17 = sbr.rel target = $region3
    $region8: #{tpu_custom_call.1} parent=1 // loop_exit
      _
    %788 = vsyncpa [#allocation3], 1
    %s789 = scalar_lea.sflag [#allocation3], 1
    %790 = vsyncpa %s789, 1
    %791 = vsyncpa [#allocation6], 1
    %s792 = scalar_lea.sflag [#allocation6], 1
    %793 = vsyncpa %s792, 1
    %794 = vsyncpa [#allocation4], 1
    %s795 = scalar_lea.sflag [#allocation4], 1
    %796 = vsyncpa %s795, 1

</llo_original>
